<compile_context>
chip_gen: v7x
topology: tpu7x:2x2x1
jax: 0.10.0
libtpu: 0.0.40
codegen_flags: <defaults>
</compile_context>

<pallas_src>
import math
import functools

import jax
import jax.numpy as jnp
from jax.experimental import pallas as pl
from jax.experimental.pallas import tpu as pltpu


# ----------------------------------------------------------------------------
# Pallas kernels
# ----------------------------------------------------------------------------

def proj_kernel(x_ref, w_ref, b_ref, o_ref):
    """Fused K|V|Q projection for one node type: (N, Din) @ (Din, 3*Dout) + b."""
    o_ref[...] = (jnp.dot(x_ref[...], w_ref[...],
                          preferred_element_type=jnp.float32) + b_ref[...])


def hgt_fused_kernel(q_ref, fd_ref, k_ref, v_ref, A_ref, M_ref, adj_ref,
                     wa_ref, ba_ref, gamma_ref, beta_ref, skip_ref,
                     out_ref, acc_ref, *, num_rel, eps):
    """grid = (Nd_tiles [parallel], R [arbitrary reduction]).

    Shapes seen by the kernel:
      q_ref   (H, tile_nd, dk)    head-major query (dst)
      fd_ref  (tile_nd, Din)      dst residual features
      k_ref   (R, H, Ns, dk)      head-major keys   (VMEM resident)
      v_ref   (R, H, Ns, dk)      head-major values (VMEM resident)
      A_ref   (R, H, dk, dk)      w_att * mu / sqrt(dk)   (resident)
      M_ref   (R, H, dk, dk)      w_msg                   (resident)
      adj_ref (R, tile_nd, Ns)    int8 dense adjacency
      wa_ref  (H, dk, Dout)       a_linear weight split by head rows
      acc_ref (H, tile_nd, dk)    VMEM accumulator over relations
    """
    r = pl.program_id(1)

    @pl.when(r == 0)
    def _init():
        acc_ref[...] = jnp.zeros_like(acc_ref)

    # Per-relation, per-head K/V mixing: one batched dot_general over the head
    # axis (replaces the 75%-zero block-diagonal full-width matmuls).
    k_mix = jax.lax.dot_general(
        k_ref[r], A_ref[r],
        dimension_numbers=(((2,), (1,)), ((0,), (0,))),
        preferred_element_type=jnp.float32)                      # (H, Ns, dk)
    v_mix = jax.lax.dot_general(
        v_ref[r], M_ref[r],
        dimension_numbers=(((2,), (1,)), ((0,), (0,))),
        preferred_element_type=jnp.float32)                      # (H, Ns, dk)

    # Attention scores: contract dk directly (no .T / XLU transpose), batched
    # over heads in a single dot_general.
    scores = jax.lax.dot_general(
        q_ref[...], k_mix,
        dimension_numbers=(((2,), (2,)), ((0,), (0,))),
        preferred_element_type=jnp.float32)                      # (H, tq, Ns)

    # Mask computed once per relation step (int8 adjacency), hoisted into an
    # additive bias shared by every head.
    mask = adj_ref[r].astype(jnp.float32) > 0.0                  # (tq, Ns)
    neg_bias = jnp.where(mask, 0.0, -1e30).astype(jnp.float32)   # (tq, Ns)

    masked = scores + neg_bias[None, :, :]
    m = jnp.max(masked, axis=-1, keepdims=True)                  # (H, tq, 1)
    # Keep the explicit zeroing: fully-masked (zero-degree) dst rows must stay
    # exactly zero, matching DGL's edge_softmax + sum aggregation.
    e = jnp.where(mask[None, :, :], jnp.exp(masked - m), 0.0)
    denom = jnp.sum(e, axis=-1, keepdims=True)
    inv = pl.reciprocal(jnp.where(denom > 0.0, denom, 1.0), approx=True)
    attn = e * inv                                               # (H, tq, Ns)

    # attn @ V, batched over heads; accumulate across relations in VMEM.
    acc_ref[...] += jax.lax.dot_general(
        attn, v_mix,
        dimension_numbers=(((2,), (1,)), ((0,), (0,))),
        preferred_element_type=jnp.float32)                      # (H, tq, dk)

    @pl.when(r == num_rel - 1)
    def _finalize():
        h_mean = acc_ref[...] * jnp.float32(1.0 / num_rel)   # HeteroGraphConv 'mean'
        # a_linear on the head-major accumulator: batched (tq, dk) @ (dk, Dout)
        # then sum over heads == (tq, H*dk) @ wa.
        trans3 = jax.lax.dot_general(
            h_mean, wa_ref[...],
            dimension_numbers=(((2,), (1,)), ((0,), (0,))),
            preferred_element_type=jnp.float32)              # (H, tq, Dout)
        trans = jnp.sum(trans3, axis=0) + ba_ref[...]        # (tq, Dout)

        # skip is an SMEM scalar; splat to (1,1) so sigmoid runs on the VPU/EUP.
        skip_v = jnp.full((1, 1), skip_ref[0], dtype=jnp.float32)
        alpha = jax.nn.sigmoid(skip_v)                       # (1,1) broadcasts
        out = alpha * trans + (1.0 - alpha) * fd_ref[...]

        mean = jnp.mean(out, axis=-1, keepdims=True)
        var = jnp.mean((out - mean) ** 2, axis=-1, keepdims=True)
        normed = (out - mean) * jax.lax.rsqrt(var + eps)
        out_ref[...] = normed * gamma_ref[...] + beta_ref[...]


# ----------------------------------------------------------------------------
# pallas_call wrappers
# ----------------------------------------------------------------------------

@functools.lru_cache(maxsize=None)
def _vmem_limit_bytes():
    """Generation-dependent scoped-VMEM limit: ~48 MiB on v7x (64 MiB VMEM),
    ~96 MiB on v5e/v6e (128 MiB VMEM)."""
    cap = 128 * 1024 * 1024
    try:
        cap = int(pltpu.get_tpu_info().vmem_capacity_bytes)
    except Exception:
        pass
    return max(32 * 1024 * 1024, min(96 * 1024 * 1024, (cap * 3) // 4))


def _round_up(x, m):
    return ((x + m - 1) // m) * m


def _pick_tile_nd(n, cap=128):
    """Row tile for the dst-node axis: aim for >= 2 tiles (v7x megacore) while
    keeping tiles 8-row aligned and <= cap."""
    if n <= 8:
        return n
    t = min(cap, _round_up((n + 1) // 2, 8))
    return min(t, _round_up(n, 8))


def run_projection(x, w3, b3):
    N, Din = x.shape
    D3 = w3.shape[1]
    tile_n = N if N <= 512 else 512      # bigger row tiles amortize pipeline overhead
    grid = (pl.cdiv(N, tile_n),)
    return pl.pallas_call(
        proj_kernel,
        out_shape=jax.ShapeDtypeStruct((N, D3), jnp.float32),
        grid=grid,
        in_specs=[pl.BlockSpec((tile_n, Din), lambda i: (i, 0)),
                  pl.BlockSpec((Din, D3), lambda i: (0, 0)),
                  pl.BlockSpec((1, D3), lambda i: (0, 0))],
        out_specs=pl.BlockSpec((tile_n, D3), lambda i: (i, 0)),
        compiler_params=pltpu.CompilerParams(
            dimension_semantics=("parallel",),
            vmem_limit_bytes=_vmem_limit_bytes()),
    )(x, w3, b3)


def run_hgt_fused(q_h, feat_dst, k_stack, v_stack, A_stack, M_stack,
                  adj_stack, nt_p, *, eps=1e-5):
    H, Nd, d_k = q_h.shape
    Din = feat_dst.shape[1]
    R, _, Ns, _ = k_stack.shape
    Dout = H * d_k
    tile_nd = _pick_tile_nd(Nd)
    n_i = pl.cdiv(Nd, tile_nd)
    wa3 = nt_p["wa"].reshape(H, d_k, Dout)   # split a_linear rows by head

    kernel = functools.partial(hgt_fused_kernel, num_rel=R, eps=eps)
    in_specs = [
        pl.BlockSpec((H, tile_nd, d_k), lambda i, r: (0, i, 0)),     # q (dst, head-major)
        pl.BlockSpec((tile_nd, Din), lambda i, r: (i, 0)),           # feat_dst (residual)
        pl.BlockSpec((R, H, Ns, d_k), lambda i, r: (0, 0, 0, 0)),    # K stack (resident)
        pl.BlockSpec((R, H, Ns, d_k), lambda i, r: (0, 0, 0, 0)),    # V stack (resident)
        pl.BlockSpec((R, H, d_k, d_k), lambda i, r: (0, 0, 0, 0)),   # w_att*mu/sqrt(dk)
        pl.BlockSpec((R, H, d_k, d_k), lambda i, r: (0, 0, 0, 0)),   # w_msg
        pl.BlockSpec((R, tile_nd, Ns), lambda i, r: (0, i, 0)),      # adj (int8)
        pl.BlockSpec((H, d_k, Dout), lambda i, r: (0, 0, 0)),        # wa (head-split)
        pl.BlockSpec((1, Dout), lambda i, r: (0, 0)),                # ba
        pl.BlockSpec((1, Dout), lambda i, r: (0, 0)),                # gamma
        pl.BlockSpec((1, Dout), lambda i, r: (0, 0)),                # beta
        pl.BlockSpec(memory_space=pltpu.MemorySpace.SMEM),           # skip (1,)
    ]
    return pl.pallas_call(
        kernel,
        out_shape=jax.ShapeDtypeStruct((Nd, Dout), jnp.float32),
        grid=(n_i, R),
        in_specs=in_specs,
        out_specs=pl.BlockSpec((tile_nd, Dout), lambda i, r: (i, 0)),
        scratch_shapes=[pltpu.VMEM((H, tile_nd, d_k), jnp.float32)],
        compiler_params=pltpu.CompilerParams(
            dimension_semantics=("parallel", "arbitrary"),
            vmem_limit_bytes=_vmem_limit_bytes()),
    )(q_h, feat_dst, k_stack, v_stack, A_stack, M_stack, adj_stack,
      wa3, nt_p["ba"], nt_p["gamma"], nt_p["beta"], nt_p["skip"])


# ----------------------------------------------------------------------------
# HGTLayer: parameter init + forward
# ----------------------------------------------------------------------------

def init_hgt_layer_params(key, in_dim, out_dim, num_heads, ntypes, etypes):
    d_k = out_dim // num_heads
    xav = math.sqrt(6.0 / (d_k + d_k))
    params = {"ntype": {}, "etype": {}}
    for nt in ntypes:
        key, *ks = jax.random.split(key, 9)
        params["ntype"][nt] = {
            "wk": 0.1 * jax.random.normal(ks[0], (in_dim, out_dim), jnp.float32),
            "bk": 0.01 * jax.random.normal(ks[1], (1, out_dim), jnp.float32),
            "wq": 0.1 * jax.random.normal(ks[2], (in_dim, out_dim), jnp.float32),
            "bq": 0.01 * jax.random.normal(ks[3], (1, out_dim), jnp.float32),
            "wv": 0.1 * jax.random.normal(ks[4], (in_dim, out_dim), jnp.float32),
            "bv": 0.01 * jax.random.normal(ks[5], (1, out_dim), jnp.float32),
            "wa": 0.1 * jax.random.normal(ks[6], (out_dim, out_dim), jnp.float32),
            "ba": 0.01 * jax.random.normal(ks[7], (1, out_dim), jnp.float32),
            "skip": jnp.ones((1,), jnp.float32),
            "gamma": jnp.ones((1, out_dim), jnp.float32),
            "beta": jnp.zeros((1, out_dim), jnp.float32),
        }
    for rel in etypes:
        key, k1, k2 = jax.random.split(key, 3)
        params["etype"][rel] = {
            "w_att": jax.random.uniform(k1, (num_heads, d_k, d_k), jnp.float32,
                                        -xav, xav),
            "w_msg": jax.random.uniform(k2, (num_heads, d_k, d_k), jnp.float32,
                                        -xav, xav),
            "mu": jnp.ones((num_heads,), jnp.float32),
        }
    return params


def _pad_rows(x, n):
    pad = n - x.shape[0]
    return x if pad == 0 else jnp.pad(x, ((0, pad), (0, 0)))


def _to_head_major(x, num_heads, d_k):
    """(N, H*dk) -> (H, N, dk). Pure-JAX layout plumbing outside the kernel."""
    n = x.shape[0]
    return jnp.transpose(x.reshape(n, num_heads, d_k), (1, 0, 2))


def hgt_layer_forward(params, etypes, adjs, feats, eps=1e-5):
    """feats: Dict[ntype, (N_i, d_in)]; adjs: Dict[canonical_etype, int8 (N_dst, N_src)]."""
    any_nt = next(iter(params["ntype"]))
    out_dim = params["ntype"][any_nt]["wk"].shape[1]
    H, d_k, _ = params["etype"][etypes[0]]["w_att"].shape
    scale = 1.0 / math.sqrt(d_k)

    # 1) Shared per-node-type K|V|Q projections (computed once, reused by every
    #    relation touching that node type), stored head-major for the attention
    #    kernel's batched per-head dot_generals.
    kvq = {}
    for nt, x in feats.items():
        p = params["ntype"][nt]
        w3 = jnp.concatenate([p["wk"], p["wv"], p["wq"]], axis=1)
        b3 = jnp.concatenate([p["bk"], p["bv"], p["bq"]], axis=1)
        proj = run_projection(x, w3, b3)
        kvq[nt] = (proj[:, :out_dim],                 # k_raw   (N, Dout)
                   proj[:, out_dim:2 * out_dim],      # v_raw   (N, Dout)
                   proj[:, 2 * out_dim:])             # q       (N, Dout)

    # 2) Group relations by destination type; one fused pallas_call per dst
    #    type does attention + cross-relation mean + a_linear/skip/LayerNorm.
    rels_by_dst = {}
    for rel in etypes:
        rels_by_dst.setdefault(rel[2], []).append(rel)

    out_feats = {}
    for dtype, rels in rels_by_dst.items():
        Ns_max = max(feats[s].shape[0] for (s, _, _) in rels)
        ks, vs, As, Ms, ads = [], [], [], [], []
        for rel in rels:
            stype = rel[0]
            ep = params["etype"][rel]
            k_raw, v_raw, _ = kvq[stype]
            ks.append(_to_head_major(_pad_rows(k_raw, Ns_max), H, d_k))
            vs.append(_to_head_major(_pad_rows(v_raw, Ns_max), H, d_k))
            # Fold mu[h]/sqrt(d_k) into the per-head attention mix.
            As.append(ep["w_att"] * (ep["mu"][:, None, None] * scale))
            Ms.append(ep["w_msg"])
            adj = adjs[rel].astype(jnp.int8)
            pad = Ns_max - adj.shape[1]
            if pad:
                adj = jnp.pad(adj, ((0, 0), (0, pad)))   # padded srcs are masked out
            ads.append(adj)
        q_h = _to_head_major(kvq[dtype][2], H, d_k)       # (H, Nd, dk)
        out_feats[dtype] = run_hgt_fused(
            q_h, feats[dtype],
            jnp.stack(ks), jnp.stack(vs), jnp.stack(As), jnp.stack(Ms),
            jnp.stack(ads), params["ntype"][dtype], eps=eps)
    return out_feats


# ----------------------------------------------------------------------------
# Pure-JAX reference (correctness check against the PyTorch semantics)
# ----------------------------------------------------------------------------

def _ref_attention(feat_src, feat_dst, adj, rel_p):
    Dout = rel_p["wk"].shape[1]
    H, d_k = rel_p["w_att"].shape[0], rel_p["w_att"].shape[1]
    k = (feat_src @ rel_p["wk"] + rel_p["bk"]).reshape(-1, H, d_k)
    v = (feat_src @ rel_p["wv"] + rel_p["bv"]).reshape(-1, H, d_k)
    q = (feat_dst @ rel_p["wq"] + rel_p["bq"]).reshape(-1, H, d_k)
    k = jnp.einsum("nhi,hij->nhj", k, rel_p["w_att"])
    v = jnp.einsum("nhi,hij->nhj", v, rel_p["w_msg"])
    scores = jnp.einsum("dhj,shj->dhs", q, k)
    scores = scores * rel_p["mu"][None, :, None] / math.sqrt(d_k)
    mask = (adj > 0)[:, None, :]
    masked = jnp.where(mask, scores, -1e30)
    m = jnp.max(masked, -1, keepdims=True)
    e = jnp.where(mask, jnp.exp(masked - m), 0.0)
    den = jnp.sum(e, -1, keepdims=True)
    attn = e / jnp.where(den > 0, den, 1.0)
    out = jnp.einsum("dhs,shj->dhj", attn, v)
    return out.reshape(-1, Dout)


def _ref_forward(params, etypes, adjs, feats, eps=1e-5):
    per_dst = {}
    for rel in etypes:
        stype, _, dtype = rel
        ep = params["etype"][rel]
        sp, dp = params["ntype"][stype], params["ntype"][dtype]
        rel_p = {"wk": sp["wk"], "bk": sp["bk"], "wv": sp["wv"], "bv": sp["bv"],
                 "wq": dp["wq"], "bq": dp["bq"],
                 "w_att": ep["w_att"], "w_msg": ep["w_msg"], "mu": ep["mu"]}
        per_dst.setdefault(dtype, []).append(
            _ref_attention(feats[stype], feats[dtype], adjs[rel], rel_p))
    hs = {nt: jnp.mean(jnp.stack(o, 0), 0) for nt, o in per_dst.items()}
    outs = {}
    for nt, h in hs.items():
        p = params["ntype"][nt]
        trans = h @ p["wa"] + p["ba"]
        alpha = jax.nn.sigmoid(p["skip"])
        out = alpha * trans + (1 - alpha) * feats[nt]
        mean = jnp.mean(out, -1, keepdims=True)
        var = jnp.mean((out - mean) ** 2, -1, keepdims=True)
        outs[nt] = (out - mean) * jax.lax.rsqrt(var + eps) * p["gamma"] + p["beta"]
    return outs


# ----------------------------------------------------------------------------
# main
# ----------------------------------------------------------------------------

if __name__ == "__main__":
    in_dim = 32        # in_dim == out_dim so the gated residual is well-defined
    out_dim = 32
    num_heads = 4
    ntypes = ["user", "item"]
    etypes = [("user", "follows", "user"),
              ("user", "buys", "item"),
              ("item", "bought-by", "user")]
    num_nodes = {"user": 8, "item": 8}

    key = jax.random.PRNGKey(0)
    key, kp = jax.random.split(key)
    params = init_hgt_layer_params(kp, in_dim, out_dim, num_heads, ntypes, etypes)

    feats = {}
    for nt in ntypes:
        key, kf = jax.random.split(key)
        feats[nt] = jax.random.normal(kf, (num_nodes[nt], in_dim), jnp.float32)

    adjs = {}
    for rel in etypes:
        stype, _, dtype = rel
        key, ka = jax.random.split(key)
        adjs[rel] = (jax.random.uniform(ka, (num_nodes[dtype], num_nodes[stype]))
                     < 0.5).astype(jnp.int8)       # int8 adjacency (4x less DMA)

    out = hgt_layer_forward(params, etypes, adjs, feats)
    out = {nt: jax.block_until_ready(v) for nt, v in out.items()}

    ref = _ref_forward(params, etypes, adjs, feats)
    for nt in out:
        assert out[nt].shape == (num_nodes[nt], out_dim)
        err = float(jnp.max(jnp.abs(out[nt] - ref[nt])))
        # tolerance relaxed slightly vs pure-f32 since the kernel uses the EUP
        # approx reciprocal for the softmax denominator
        assert err < 2e-2, f"mismatch for {nt}: {err}"

    print("KERNEL_OK")
</pallas_src>

<mosaic_0001>
module attributes {stable_mosaic.version = 11 : i64} {
  func.func @proj_kernel(%arg0: i32, %arg1: memref<8x32xf32, #tpu.memory_space<vmem>>, %arg2: memref<32x96xf32, #tpu.memory_space<vmem>>, %arg3: memref<1x96xf32, #tpu.memory_space<vmem>>, %arg4: memref<8x96xf32, #tpu.memory_space<vmem>>) attributes {dimension_semantics = [#tpu.dimension_semantics<parallel>], iteration_bounds = array<i64: 1>, scalar_prefetch = 0 : i64, scratch_operands = 0 : i64, tpu.core_type = #tpu.core_type<tc>, window_params = [{transform_indices = @transform_0, window_bounds = array<i64: 8, 32>}, {pipeline_mode = #tpu.pipeline_mode<synchronous>, transform_indices = @transform_1, window_bounds = array<i64: 32, 96>}, {pipeline_mode = #tpu.pipeline_mode<synchronous>, transform_indices = @transform_2, window_bounds = array<i64: 1, 96>}, {transform_indices = @transform_3, window_bounds = array<i64: 8, 96>}]} {
    %c0 = arith.constant 0 : index
    %c0_0 = arith.constant 0 : index
    %0 = vector.load %arg1[%c0, %c0_0] : memref<8x32xf32, #tpu.memory_space<vmem>>, vector<8x32xf32>
    %c0_1 = arith.constant 0 : index
    %c0_2 = arith.constant 0 : index
    %1 = vector.load %arg2[%c0_1, %c0_2] : memref<32x96xf32, #tpu.memory_space<vmem>>, vector<32x96xf32>
    %cst = arith.constant dense<0.000000e+00> : vector<8x96xf32>
    %2 = tpu.matmul %0, %1, %cst {dimension_numbers = #tpu.dot_dimension_numbers<[1], [0], [0], [1], [0, 0, 1, 1], [], []>} : vector<8x32xf32>, vector<32x96xf32>, vector<8x96xf32> -> vector<8x96xf32>
    %c0_3 = arith.constant 0 : index
    %c0_4 = arith.constant 0 : index
    %3 = vector.load %arg3[%c0_3, %c0_4] : memref<1x96xf32, #tpu.memory_space<vmem>>, vector<1x96xf32>
    %4 = vector.broadcast %3 : vector<1x96xf32> to vector<8x96xf32>
    %5 = arith.addf %2, %4 : vector<8x96xf32>
    %c0_5 = arith.constant 0 : index
    %c0_6 = arith.constant 0 : index
    %6 = vector.load %arg4[%c0_5, %c0_6] : memref<8x96xf32, #tpu.memory_space<vmem>>, vector<8x96xf32>
    tpu.vector_store %arg4[%c0_5, %c0_6], %5 {strides = array<i32>} : memref<8x96xf32, #tpu.memory_space<vmem>>, vector<8x96xf32>,
    return
  }
  func.func @transform_0(%arg0: i32) -> (i32, i32) {
    %c0_i32 = arith.constant 0 : i32
    %c0_i32_0 = arith.constant 0 : i32
    return %arg0, %c0_i32 : i32, i32
  }
  func.func @transform_1(%arg0: i32) -> (i32, i32) {
    %c0_i32 = arith.constant 0 : i32
    %c0_i32_0 = arith.constant 0 : i32
    %c0_i32_1 = arith.constant 0 : i32
    return %c0_i32, %c0_i32_0 : i32, i32
  }
  func.func @transform_2(%arg0: i32) -> (i32, i32) {
    %c0_i32 = arith.constant 0 : i32
    %c0_i32_0 = arith.constant 0 : i32
    %c0_i32_1 = arith.constant 0 : i32
    return %c0_i32, %c0_i32_0 : i32, i32
  }
  func.func @transform_3(%arg0: i32) -> (i32, i32) {
    %c0_i32 = arith.constant 0 : i32
    %c0_i32_0 = arith.constant 0 : i32
    return %arg0, %c0_i32 : i32, i32
  }
}

</mosaic_0001>

<llo_original>
// kernel: tpu_custom_call.1
$region0: #{tpu_custom_call.1}
  #allocation0 [shape = 'u32[]', space=smem, size = 0x4, offset = 0x4, fixed_abs, tag = 'smem constant byte address 0x4 - core index']
  #allocation1 [shape = 'u32[144,128]{1,0:T(1,128)}', space=vmem, size = 0x12000, scoped, tag = 'internal scratch']
  %s0 = inlined_call_operand.hbm [shape: f32[8,32], index: 0, kind: input, shape index: {}]
  %s1 = inlined_call_operand.hbm [shape: f32[32,96], index: 1, kind: input, shape index: {}]
  %s2 = inlined_call_operand.hbm [shape: f32[1,96], index: 2, kind: input, shape index: {}]
  %s3 = inlined_call_operand.hbm [shape: f32[8,96], index: 3, kind: output, shape index: {}]
  %s4 = sld [smem:[#allocation0]]
  $region34: #{tpu_custom_call.1} parent=0
    _
  %s6 = ssub.s32 1, %s4
  %s7 = scalar_select 0, %s6, %s4
  $region1: #{tpu_custom_call.1} parent=0
    #allocation2 [shape = 'u8[4096]{0}', space=vmem, size = 0x1000, scoped, tag = 'input window, operand 0, single buffered']
    #allocation3 [shape = 's32[1]{0}', space=sflag, size = 0x4, scoped, tag = 'scoped memory for tpu_custom_call.1']
    #allocation4 [shape = 's32[1]{0}', space=sflag, size = 0x4, scoped, tag = 'scoped memory for tpu_custom_call.1']
    #allocation5 [shape = 'u8[16384]{0}', space=vmem, size = 0x4000, scoped, tag = 'input window, operand 1, single buffered']
    #allocation6 [shape = 's32[1]{0}', space=sflag, size = 0x4, scoped, tag = 'scoped memory for tpu_custom_call.1']
    #allocation7 [shape = 'u8[512]{0}', space=vmem, size = 0x400, scoped, tag = 'input window, operand 2, single buffered']
    #allocation8 [shape = 'u8[4096]{0}', space=vmem, size = 0x1000, scoped, tag = 'output window, operand 0, single buffered']
    %8 = vsyncpa [#allocation3], 0
    %9 = vsyncpa [#allocation6], 0
    %10 = vsyncpa [#allocation4], 0
    // Predicated region
    $region2: #{tpu_custom_call.1} parent=1 // pred_check
      _
    $region3: #{tpu_custom_call.1} parent=1 // pred_check_branch
      %12 = sbr.rel (0) target = $region5
    $region4: #{tpu_custom_call.1} parent=1 // pred_region
      %s14 = ssub.s32 128, 128
      %15 = vsyncadd [#allocation3], %s14
      %s17 = sshll.u32 [#allocation2], 4
      %s18 = int_to_ptr.vmem [resolvable:$true] %s17
      %20 = dma.hbm_to_vmem [thread:$0]  %s0, 128, %s18, [#allocation3]
    $region5: #{tpu_custom_call.1} parent=1 // pred_fallthru
      _
    // Predicated region
    $region6: #{tpu_custom_call.1} parent=1 // pred_check
      _
    $region7: #{tpu_custom_call.1} parent=1 // pred_check_branch
      %22 = sbr.rel (0) target = $region9
    $region8: #{tpu_custom_call.1} parent=1 // pred_region
      %s24 = ssub.s32 512, 512
      %25 = vsyncadd [#allocation6], %s24
      %s26 = sshll.u32 [#allocation5], 4
      %s27 = int_to_ptr.vmem [resolvable:$true] %s26
      %32 = dma.hbm_to_vmem [thread:$0]  %s1, 512, %s27, [#allocation6], 128, 128, 8
    $region9: #{tpu_custom_call.1} parent=1 // pred_fallthru
      _
    // Predicated region
    $region10: #{tpu_custom_call.1} parent=1 // pred_check
      _
    $region11: #{tpu_custom_call.1} parent=1 // pred_check_branch
      %34 = sbr.rel (0) target = $region13
    $region12: #{tpu_custom_call.1} parent=1 // pred_region
      %s36 = ssub.s32 16, 16
      %37 = vsyncadd [#allocation6], %s36
      %s39 = sshll.u32 [#allocation7], 4
      %s40 = int_to_ptr.vmem [resolvable:$true] %s39
      %42 = dma.hbm_to_vmem [thread:$0]  %s2, 16, %s40, [#allocation6]
    $region13: #{tpu_custom_call.1} parent=1 // pred_fallthru
      _
    // Predicated region
    $region14: #{tpu_custom_call.1} parent=1 // pred_check
      _
    $region15: #{tpu_custom_call.1} parent=1 // pred_check_branch
      %44 = sbr.rel (0) target = $region17
    $region16: #{tpu_custom_call.1} parent=1 // pred_region
      %45 = dma.done [#allocation3], 128
    $region17: #{tpu_custom_call.1} parent=1 // pred_fallthru
      _
    // Predicated region
    $region18: #{tpu_custom_call.1} parent=1 // pred_check
      _
    $region19: #{tpu_custom_call.1} parent=1 // pred_check_branch
      %47 = sbr.rel (0) target = $region21
    $region20: #{tpu_custom_call.1} parent=1 // pred_region
      %48 = dma.done [#allocation6], 512
    $region21: #{tpu_custom_call.1} parent=1 // pred_fallthru
      _
    // Predicated region
    $region22: #{tpu_custom_call.1} parent=1 // pred_check
      _
    $region23: #{tpu_custom_call.1} parent=1 // pred_check_branch
      %50 = sbr.rel (0) target = $region25
    $region24: #{tpu_custom_call.1} parent=1 // pred_region
      %51 = dma.done [#allocation6], 16
    $region25: #{tpu_custom_call.1} parent=1 // pred_fallthru
      _
    %v52 = vld [vmem:[#allocation2] sm:$0xff]
    %v53 = vld [vmem:[#allocation5] sm:$0xff]
    %v54 = vld [vmem:[#allocation5 + $0x8] sm:$0xff]
    %v55 = vld [vmem:[#allocation5 + $0x10] sm:$0xff]
    %v56 = vld [vmem:[#allocation5 + $0x18] sm:$0xff]
    %v57 = vld [vmem:[#allocation7] sm:$0x1]
    %v59 = vlaneseq
    %v60 = vshrl.u32 %v59, 7
    %v61 = vsub.s32 0, %v60
    %v62 = vrot.slane %v57, %v61
    %vm64 = vcmask 261120
    %v66 = vsel %vm64, %v52, 0
    %68 = vmatprep.subr.mxu0 0.0
    %69 = vmatpush1.msra.mxu0 %v53
    %70 = vmatprep.subr.mxu0 0.0
    %71 = vmatpush1.msra.mxu0 %v54
    %72 = vmatprep.subr.mxu0 0.0
    %73 = vmatpush1.msra.mxu0 %v55
    %74 = vmatprep.subr.mxu0 0.0
    %75 = vmatpush1.msra.mxu0 %v56
    %76 = vmatprep.subr.mxu0 0.0
    %77 = vmatpush1.msra.mxu0 0.0
    %78 = vmatprep.subr.mxu0 0.0
    %79 = vmatpush1.msra.mxu0 0.0
    %80 = vmatprep.subr.mxu0 0.0
    %81 = vmatpush1.msra.mxu0 0.0
    %82 = vmatprep.subr.mxu0 0.0
    %83 = vmatpush1.msra.mxu0 0.0
    %84 = vmatprep.subr.mxu0 0.0
    %85 = vmatpush1.msra.mxu0 0.0
    %86 = vmatprep.subr.mxu0 0.0
    %87 = vmatpush1.msra.mxu0 0.0
    %88 = vmatprep.subr.mxu0 0.0
    %89 = vmatpush1.msra.mxu0 0.0
    %90 = vmatprep.subr.mxu0 0.0
    %91 = vmatpush1.msra.mxu0 0.0
    %92 = vmatprep.subr.mxu0 0.0
    %93 = vmatpush1.msra.mxu0 0.0
    %94 = vmatprep.subr.mxu0 0.0
    %95 = vmatpush1.msra.mxu0 0.0
    %96 = vmatprep.subr.mxu0 0.0
    %97 = vmatpush1.msra.mxu0 0.0
    %98 = vmatprep.subr.mxu0 0.0
    %99 = vmatpush1.msra.mxu0 0.0
    %100 = vmatprep.subr.mxu0 0.0
    %101 = vmatpush1.msra.mxu0 0.0
    %102 = vmatprep.subr.mxu0 0.0
    %103 = vmatpush1.msra.mxu0 0.0
    %104 = vmatprep.subr.mxu0 0.0
    %105 = vmatpush1.msra.mxu0 0.0
    %106 = vmatprep.subr.mxu0 0.0
    %107 = vmatpush1.msra.mxu0 0.0
    %108 = vmatprep.subr.mxu0 0.0
    %109 = vmatpush1.msra.mxu0 0.0
    %110 = vmatprep.subr.mxu0 0.0
    %111 = vmatpush1.msra.mxu0 0.0
    %112 = vmatprep.subr.mxu0 0.0
    %113 = vmatpush1.msra.mxu0 0.0
    %114 = vmatprep.subr.mxu0 0.0
    %115 = vmatpush1.msra.mxu0 0.0
    %116 = vmatprep.subr.mxu0 0.0
    %117 = vmatpush1.msra.mxu0 0.0
    %118 = vmatprep.subr.mxu0 0.0
    %119 = vmatpush1.msra.mxu0 0.0
    %120 = vmatprep.subr.mxu0 0.0
    %121 = vmatpush1.msra.mxu0 0.0
    %122 = vmatprep.subr.mxu0 0.0
    %123 = vmatpush1.msra.mxu0 0.0
    %124 = vmatprep.subr.mxu0 0.0
    %125 = vmatpush1.msra.mxu0 0.0
    %126 = vmatprep.subr.mxu0 0.0
    %127 = vmatpush1.msra.mxu0 0.0
    %128 = vmatprep.subr.mxu0 0.0
    %129 = vmatpush1.msra.mxu0 0.0
    %130 = vmatprep.subr.mxu0 0.0
    %131 = vmatpush1.msra.mxu0 0.0
    %132 = vmatprep.mubr.f32.mxu0 0.0
    %133 = vmatmul.mubr.f32.gmra.mrb[0].mxu0 %v66
    %v134 = vpop.f32.mrb[0].mxu0
    %v135 = vadd.f32 %v62, %v134
    %v136 = vpop.f32.mrb[0].mxu0
    %137 = vdwg.mxu0
    %vm138 = vcmask 785408
    %139 = vst.msk [vmem:[#allocation8] sm:$0xff] %vm138, %v135
    // Predicated region
    $region26: #{tpu_custom_call.1} parent=1 // pred_check
      _
    $region27: #{tpu_custom_call.1} parent=1 // pred_check_branch
      %141 = sbr.rel (0) target = $region29
    $region28: #{tpu_custom_call.1} parent=1 // pred_region
      %s143 = ssub.s32 128, 128
      %144 = vsyncadd [#allocation4], %s143
      %s146 = sshll.u32 [#allocation8], 4
      %s147 = int_to_ptr.vmem [resolvable:$true] %s146
      %149 = dma.vmem_to_hbm [thread:$0]  %s147, 128, %s3, [#allocation4]
    $region29: #{tpu_custom_call.1} parent=1 // pred_fallthru
      _
    // Predicated region
    $region30: #{tpu_custom_call.1} parent=1 // pred_check
      _
    $region31: #{tpu_custom_call.1} parent=1 // pred_check_branch
      %151 = sbr.rel (0) target = $region33
    $region32: #{tpu_custom_call.1} parent=1 // pred_region
      %152 = dma.done [#allocation4], 128
    $region33: #{tpu_custom_call.1} parent=1 // pred_fallthru
      _
    %153 = vsyncpa [#allocation3], 1
    %154 = vsyncpa [#allocation6], 1
    %155 = vsyncpa [#allocation4], 1

</llo_original>
